<compile_context>
chip_gen: v6e
topology: v6e:2x2x1
jax: 0.10.0
libtpu: 0.0.40
codegen_flags: <defaults>
</compile_context>

<pallas_src>
import functools

import jax
import jax.numpy as jnp
from jax.experimental import pallas as pl
from jax.experimental.pallas import tpu as pltpu

_HIGHEST = jax.lax.Precision.HIGHEST


def _round_up(x, m):
    return (x + m - 1) // m * m


def _bilinear_matrix(out_size, in_size, dtype=jnp.float32):
    """Interpolation matrix W (out_size, in_size): y = W @ x, align_corners=True."""
    if in_size == 1:
        return jnp.ones((out_size, 1), dtype=dtype)
    i = jnp.arange(out_size, dtype=jnp.float32)
    if out_size == 1:
        s = jnp.zeros((1,), dtype=jnp.float32)
    else:
        s = i * (in_size - 1) / (out_size - 1)
    i0 = jnp.clip(jnp.floor(s).astype(jnp.int32), 0, in_size - 1)
    i1 = jnp.clip(i0 + 1, 0, in_size - 1)
    frac = s - i0.astype(jnp.float32)
    eye = jnp.eye(in_size, dtype=jnp.float32)
    w = (1.0 - frac)[:, None] * eye[i0] + frac[:, None] * eye[i1]
    return w.astype(dtype)


def _upsample_bilinear_nhwc(c2, h, w):
    """align_corners=True bilinear upsample of NCHW c2 to (h, w); returns NHWC f32."""
    _, _, h2, w2 = c2.shape
    wh = _bilinear_matrix(h, h2)                                       # (H, H2)
    ww = _bilinear_matrix(w, w2)                                       # (W, W2)
    x2 = jnp.transpose(c2, (0, 2, 3, 1)).astype(jnp.float32)           # (N, H2, W2, C)
    up = jnp.einsum('hk,nklc->nhlc', wh, x2, precision=_HIGHEST)       # (N, H, W2, C)
    up = jnp.einsum('wl,nhlc->nhwc', ww, up, precision=_HIGHEST)       # (N, H, W, C)
    return up


def _local_up_kernel(x1_ref, w_ref, bias_ref, up_ref, o_ref, acc_ref, *, tile_cin):
    # x1_ref:   (1, TILE_HW, TILE_CIN) bf16  current spatial/Cin tile, channel-last
    # w_ref:    (CIN, CPAD)            bf16  full folded 1x1 weight, VMEM-resident
    # bias_ref: (1, CPAD)              f32   folded BN bias
    # up_ref:   (1, TILE_HW, CPAD)     bf16  precomputed bilinear upsample of c2
    # o_ref:    (1, TILE_HW, CPAD)
    # acc_ref:  (TILE_HW, CPAD)        f32   conv accumulator (reduction over Cin tiles)
    k = pl.program_id(2)

    @pl.when(k == 0)
    def _():
        # fold the BN bias into the accumulator init (removes a VPU add + VMEM
        # read from the serial epilogue)
        acc_ref[...] = jnp.broadcast_to(bias_ref[...], acc_ref.shape)

    koff = pl.multiple_of(k * tile_cin, tile_cin)
    acc_ref[...] += jnp.dot(x1_ref[0], w_ref[pl.ds(koff, tile_cin), :],
                            preferred_element_type=jnp.float32)

    @pl.when(k == pl.num_programs(2) - 1)
    def _():
        y = jnp.maximum(acc_ref[...], 0.0)                             # ReLU(conv + bias)
        o_ref[0] = (y + up_ref[0].astype(jnp.float32)).astype(o_ref.dtype)


def _vmem_bytes_estimate(tile_hw, tile_cin, cin, cpad, out_itemsize):
    """Rough per-kernel VMEM footprint (default double buffers included)."""
    return (2 * tile_hw * tile_cin * 2            # x1 (bf16, 2 bufs)
            + 2 * cin * cpad * 2                  # weight (bf16, 2 bufs, fetched once)
            + 2 * cpad * 4                        # bias (f32, 2 bufs)
            + 2 * tile_hw * cpad * 2              # upsample stream (bf16, 2 bufs)
            + 2 * tile_hw * cpad * out_itemsize   # output (2 bufs)
            + tile_hw * cpad * 4)                 # f32 accumulator scratch


def _valid_tile_hs(h, w):
    """Divisors of h whose tile_h*w satisfies the bf16 (16, 128) sublane constraint."""
    return [t for t in range(1, h + 1)
            if h % t == 0 and ((t * w) % 16 == 0 or t == h)]


def local_up(c1, c2, conv_w, bn_gamma, bn_beta, bn_mean, bn_var,
             eps=1e-5, tile_h=None, tile_cin=None):
    """localUp.forward (inference-mode BN): ReLU(BN(conv1x1(c1))) + up(c2, (H, W))."""
    n, cin, h, w = c1.shape
    n2, cout, h2, w2 = c2.shape
    assert n2 == n
    hw = h * w
    # Lane-dense output channels.  (On v6e/v7x with Cout > 128, a 256 multiple
    # keeps the 2x256^2 MXU fully fed; production Cout here are already
    # multiples of 256, so 128 only matters for small test Cout.)
    cpad = _round_up(cout, 128)
    out_dtype = c1.dtype

    # ---- tile selection (re-derived per generation via VMEM capacity) -------
    if tile_cin is None:
        tile_cin = min(cin, 512)
        while cin % tile_cin:
            tile_cin //= 2
    assert cin % tile_cin == 0 and (tile_cin == cin or tile_cin % 128 == 0), \
        f"bad tile_cin={tile_cin} for cin={cin}"

    try:
        vmem_cap = int(pltpu.get_tpu_info().vmem_capacity_bytes)
    except Exception:                          # conservative fallback: v7x per-TC
        vmem_cap = 64 * 1024 * 1024
    vmem_budget = int(vmem_cap * 0.75)
    out_isize = jnp.dtype(out_dtype).itemsize

    cands = _valid_tile_hs(h, w)
    if tile_h is None:
        # target ~512 spatial positions per tile (past the per-step-overhead knee)
        target = max(1, 512 // max(w, 1))
        fits = [t for t in cands if t <= target]
        tile_h = max(fits) if fits else min(cands)
        # With a single batch, the spatial axis is the only 'parallel' axis:
        # keep >= 2 tiles so both v7x TensorCores get work.
        if n == 1 and h // tile_h < 2:
            smaller = [t for t in cands if t < tile_h and h // t >= 2]
            if smaller:
                tile_h = max(smaller)
        # Shrink tile_h (before tile_cin) until the VMEM estimate fits.
        while _vmem_bytes_estimate(tile_h * w, tile_cin, cin, cpad,
                                   out_isize) > vmem_budget:
            smaller = [t for t in cands if t < tile_h]
            if not smaller:
                break
            tile_h = max(smaller)
    assert h % tile_h == 0 and ((tile_h * w) % 16 == 0 or tile_h == h), \
        f"tile_h={tile_h} violates the (16, 128) block constraint for W={w}"
    tile_hw = tile_h * w

    est = _vmem_bytes_estimate(tile_hw, tile_cin, cin, cpad, out_isize)
    vmem_limit = int(min(vmem_cap, max(32 * 1024 * 1024, est + (16 << 20))))

    # ---- glue (plain JAX): BN folding + layout ------------------------------
    inv_std = 1.0 / jnp.sqrt(bn_var.astype(jnp.float32) + eps)
    scale = bn_gamma.astype(jnp.float32) * inv_std                      # (Cout,)
    bias = bn_beta.astype(jnp.float32) - bn_mean.astype(jnp.float32) * scale

    wmat = conv_w.reshape(cout, cin).astype(jnp.float32) * scale[:, None]  # fold BN scale
    wmat = jnp.pad(wmat, ((0, cpad - cout), (0, 0))).T                     # (Cin, CPAD)
    wmat_bf = wmat.astype(jnp.bfloat16)
    bias_p = jnp.pad(bias, (0, cpad - cout)).reshape(1, cpad)

    # Activations channel-last, bf16 for the MXU path.
    # (NCHW<->NHWC transposes + f32/pad-slice output are wrapper glue for the
    #  PyTorch-facing layout; an NHWC bf16 end-to-end model would drop them.)
    x1 = jnp.transpose(c1, (0, 2, 3, 1)).reshape(n, hw, cin).astype(jnp.bfloat16)

    # Bilinear upsample fully precomputed in the wrapper, streamed as bf16 and
    # indexed exactly like the output (no finalize matmul / reshape in-kernel).
    up = _upsample_bilinear_nhwc(c2, h, w)                              # (N, H, W, Cout)
    up = jnp.pad(up, ((0, 0), (0, 0), (0, 0), (0, cpad - cout)))
    up_bf = up.reshape(n, hw, cpad).astype(jnp.bfloat16)

    out = pl.pallas_call(
        functools.partial(_local_up_kernel, tile_cin=tile_cin),
        out_shape=jax.ShapeDtypeStruct((n, hw, cpad), out_dtype),
        grid_spec=pltpu.PrefetchScalarGridSpec(
            num_scalar_prefetch=0,
            grid=(n, h // tile_h, cin // tile_cin),
            in_specs=[
                pl.BlockSpec((1, tile_hw, tile_cin), lambda b, i, k: (b, i, k)),
                pl.BlockSpec((cin, cpad), lambda b, i, k: (0, 0)),      # resident weight
                pl.BlockSpec((1, cpad), lambda b, i, k: (0, 0)),        # folded bias
                pl.BlockSpec((1, tile_hw, cpad), lambda b, i, k: (b, i, 0)),  # upsample
            ],
            out_specs=pl.BlockSpec((1, tile_hw, cpad), lambda b, i, k: (b, i, 0)),
            scratch_shapes=[pltpu.VMEM((tile_hw, cpad), jnp.float32)],
        ),
        compiler_params=pltpu.CompilerParams(
            dimension_semantics=("parallel", "parallel", "arbitrary"),
            vmem_limit_bytes=vmem_limit,
        ),
    )(x1, wmat_bf, bias_p, up_bf)

    out = out[:, :, :cout]                                    # drop channel padding
    return out.reshape(n, h, w, cout).transpose(0, 3, 1, 2)   # back to NCHW


def _reference(c1, c2, conv_w, bn_gamma, bn_beta, bn_mean, bn_var, eps=1e-5):
    """Pure-JAX reference mirroring the kernel's bf16 operand precision."""
    n, cin, h, w = c1.shape
    _, cout, h2, w2 = c2.shape
    inv_std = 1.0 / jnp.sqrt(bn_var + eps)
    scale = bn_gamma * inv_std
    bias = bn_beta - bn_mean * scale
    wm = (conv_w.reshape(cout, cin) * scale[:, None]).astype(jnp.bfloat16).astype(jnp.float32)
    x1 = c1.astype(jnp.bfloat16).astype(jnp.float32)
    y = jnp.einsum('nchw,oc->nohw', x1, wm, precision=_HIGHEST)
    y = jnp.maximum(y + bias[None, :, None, None], 0.0)
    up = _upsample_bilinear_nhwc(c2, h, w)                    # (N, H, W, Cout) f32
    up = up.astype(jnp.bfloat16).astype(jnp.float32)          # kernel streams bf16
    return y + jnp.transpose(up, (0, 3, 1, 2))


if __name__ == "__main__":
    key = jax.random.PRNGKey(0)
    k1, k2, k3, k4, k5, k6, k7 = jax.random.split(key, 7)

    # Small shapes that still exercise spatial tiling and the Cin reduction axis.
    N, Cin, Cout, H, W, H2, W2 = 2, 256, 32, 16, 16, 8, 8

    c1 = jax.random.normal(k1, (N, Cin, H, W), dtype=jnp.float32)
    c2 = jax.random.normal(k2, (N, Cout, H2, W2), dtype=jnp.float32)

    conv_w = 0.1 * jax.random.normal(k3, (Cout, Cin, 1, 1), dtype=jnp.float32)
    bn_gamma = 1.0 + 0.1 * jax.random.normal(k4, (Cout,), dtype=jnp.float32)
    bn_beta = 0.1 * jax.random.normal(k5, (Cout,), dtype=jnp.float32)
    bn_mean = 0.05 * jax.random.normal(k6, (Cout,), dtype=jnp.float32)
    bn_var = jnp.abs(1.0 + 0.1 * jax.random.normal(k7, (Cout,), dtype=jnp.float32))

    out = local_up(c1, c2, conv_w, bn_gamma, bn_beta, bn_mean, bn_var,
                   tile_h=8, tile_cin=128)   # -> grid (2, 2, 2)
    out = jax.block_until_ready(out)

    ref = _reference(c1, c2, conv_w, bn_gamma, bn_beta, bn_mean, bn_var)
    assert out.shape == (N, Cout, H, W)
    max_err = float(jnp.max(jnp.abs(out - ref)))
    assert jnp.allclose(out, ref, atol=2e-3, rtol=2e-3), f"max abs err = {max_err}"
    print("KERNEL_OK")
</pallas_src>

<mosaic_0001>
module attributes {stable_mosaic.version = 11 : i64} {
  func.func @_local_up_kernel(%arg0: i32, %arg1: i32, %arg2: i32, %arg3: memref<1x128x128xbf16, #tpu.memory_space<vmem>>, %arg4: memref<256x128xbf16, #tpu.memory_space<vmem>>, %arg5: memref<1x128xf32, #tpu.memory_space<vmem>>, %arg6: memref<1x128x128xbf16, #tpu.memory_space<vmem>>, %arg7: memref<1x128x128xf32, #tpu.memory_space<vmem>>, %arg8: memref<128x128xf32, #tpu.memory_space<vmem>>) attributes {dimension_semantics = [#tpu.dimension_semantics<parallel>, #tpu.dimension_semantics<parallel>, #tpu.dimension_semantics<arbitrary>], iteration_bounds = array<i64: 2, 2, 2>, scalar_prefetch = 0 : i64, scratch_operands = 1 : i64, tpu.core_type = #tpu.core_type<tc>, window_params = [{transform_indices = @transform_0, window_bounds = array<i64: 1, 128, 128>}, {pipeline_mode = #tpu.pipeline_mode<synchronous>, transform_indices = @transform_1, window_bounds = array<i64: 256, 128>}, {pipeline_mode = #tpu.pipeline_mode<synchronous>, transform_indices = @transform_2, window_bounds = array<i64: 1, 128>}, {transform_indices = @transform_3, window_bounds = array<i64: 1, 128, 128>}, {transform_indices = @transform_4, window_bounds = array<i64: 1, 128, 128>}]} {
    %c0_i32 = arith.constant 0 : i32
    %0 = arith.cmpi eq, %arg2, %c0_i32 : i32
    %1 = arith.extui %0 : i1 to i32
    %c0_i32_0 = arith.constant 0 : i32
    %2 = arith.cmpi ne, %1, %c0_i32_0 : i32
    scf.if %2 {
      %c0_9 = arith.constant 0 : index
      %c0_10 = arith.constant 0 : index
      %16 = vector.load %arg5[%c0_9, %c0_10] : memref<1x128xf32, #tpu.memory_space<vmem>>, vector<1x128xf32>
      %17 = vector.shape_cast %16 : vector<1x128xf32> to vector<1x128xf32>
      %18 = vector.broadcast %17 : vector<1x128xf32> to vector<128x128xf32>
      %c0_11 = arith.constant 0 : index
      %c0_12 = arith.constant 0 : index
      %19 = vector.load %arg8[%c0_11, %c0_12] : memref<128x128xf32, #tpu.memory_space<vmem>>, vector<128x128xf32>
      tpu.vector_store %arg8[%c0_11, %c0_12], %18 {strides = array<i32>} : memref<128x128xf32, #tpu.memory_space<vmem>>, vector<128x128xf32>,
    } else {
    }
    %c128_i32 = arith.constant 128 : i32
    %3 = arith.muli %arg2, %c128_i32 : i32
    %4 = tpu.assume_multiple %3, 128 : i32
    %c0 = arith.constant 0 : index
    %c0_1 = arith.constant 0 : index
    %5 = vector.load %arg8[%c0, %c0_1] : memref<128x128xf32, #tpu.memory_space<vmem>>, vector<128x128xf32>
    %c0_2 = arith.constant 0 : index
    %c0_3 = arith.constant 0 : index
    %c0_4 = arith.constant 0 : index
    %6 = vector.load %arg3[%c0_2, %c0_3, %c0_4] : memref<1x128x128xbf16, #tpu.memory_space<vmem>>, vector<1x128x128xbf16>
    %7 = vector.shape_cast %6 : vector<1x128x128xbf16> to vector<128x128xbf16>
    %8 = arith.index_cast %4 : i32 to index
    %c0_5 = arith.constant 0 : index
    %9 = vector.load %arg4[%8, %c0_5] : memref<256x128xbf16, #tpu.memory_space<vmem>>, vector<128x128xbf16>
    %cst = arith.constant dense<0.000000e+00> : vector<128x128xf32>
    %10 = tpu.matmul %7, %9, %cst {dimension_numbers = #tpu.dot_dimension_numbers<[1], [0], [0], [1], [0, 0, 1, 1], [], []>} : vector<128x128xbf16>, vector<128x128xbf16>, vector<128x128xf32> -> vector<128x128xf32>
    %11 = arith.addf %5, %10 : vector<128x128xf32>
    %c0_6 = arith.constant 0 : index
    %c0_7 = arith.constant 0 : index
    %12 = vector.load %arg8[%c0_6, %c0_7] : memref<128x128xf32, #tpu.memory_space<vmem>>, vector<128x128xf32>
    tpu.vector_store %arg8[%c0_6, %c0_7], %11 {strides = array<i32>} : memref<128x128xf32, #tpu.memory_space<vmem>>, vector<128x128xf32>,
    %c1_i32 = arith.constant 1 : i32
    %13 = arith.cmpi eq, %arg2, %c1_i32 : i32
    %14 = arith.extui %13 : i1 to i32
    %c0_i32_8 = arith.constant 0 : i32
    %15 = arith.cmpi ne, %14, %c0_i32_8 : i32
    scf.if %15 {
      %c0_9 = arith.constant 0 : index
      %c0_10 = arith.constant 0 : index
      %16 = vector.load %arg8[%c0_9, %c0_10] : memref<128x128xf32, #tpu.memory_space<vmem>>, vector<128x128xf32>
      %cst_11 = arith.constant 0.000000e+00 : f32
      %17 = vector.broadcast %cst_11 : f32 to vector<128x128xf32>
      %18 = arith.maximumf %16, %17 : vector<128x128xf32>
      %c0_12 = arith.constant 0 : index
      %c0_13 = arith.constant 0 : index
      %c0_14 = arith.constant 0 : index
      %19 = vector.load %arg6[%c0_12, %c0_13, %c0_14] : memref<1x128x128xbf16, #tpu.memory_space<vmem>>, vector<1x128x128xbf16>
      %20 = vector.shape_cast %19 : vector<1x128x128xbf16> to vector<128x128xbf16>
      %21 = arith.extf %20 : vector<128x128xbf16> to vector<128x128xf32>
      %22 = arith.addf %18, %21 : vector<128x128xf32>
      %c0_15 = arith.constant 0 : index
      %c0_16 = arith.constant 0 : index
      %c0_17 = arith.constant 0 : index
      %23 = vector.load %arg7[%c0_15, %c0_16, %c0_17] : memref<1x128x128xf32, #tpu.memory_space<vmem>>, vector<1x128x128xf32>
      %24 = vector.shape_cast %23 : vector<1x128x128xf32> to vector<128x128xf32>
      %25 = vector.shape_cast %22 : vector<128x128xf32> to vector<1x128x128xf32>
      tpu.vector_store %arg7[%c0_15, %c0_16, %c0_17], %25 {strides = array<i32>} : memref<1x128x128xf32, #tpu.memory_space<vmem>>, vector<1x128x128xf32>,
    } else {
    }
    return
  }
  func.func @transform_0(%arg0: i32, %arg1: i32, %arg2: i32) -> (i32, i32, i32) {
    %c0_i32 = arith.constant 0 : i32
    return %arg0, %arg1, %arg2 : i32, i32, i32
  }
  func.func @transform_1(%arg0: i32, %arg1: i32, %arg2: i32) -> (i32, i32) {
    %c0_i32 = arith.constant 0 : i32
    %c0_i32_0 = arith.constant 0 : i32
    %c0_i32_1 = arith.constant 0 : i32
    return %c0_i32, %c0_i32_0 : i32, i32
  }
  func.func @transform_2(%arg0: i32, %arg1: i32, %arg2: i32) -> (i32, i32) {
    %c0_i32 = arith.constant 0 : i32
    %c0_i32_0 = arith.constant 0 : i32
    %c0_i32_1 = arith.constant 0 : i32
    return %c0_i32, %c0_i32_0 : i32, i32
  }
  func.func @transform_3(%arg0: i32, %arg1: i32, %arg2: i32) -> (i32, i32, i32) {
    %c0_i32 = arith.constant 0 : i32
    %c0_i32_0 = arith.constant 0 : i32
    return %arg0, %arg1, %c0_i32 : i32, i32, i32
  }
  func.func @transform_4(%arg0: i32, %arg1: i32, %arg2: i32) -> (i32, i32, i32) {
    %c0_i32 = arith.constant 0 : i32
    %c0_i32_0 = arith.constant 0 : i32
    return %arg0, %arg1, %c0_i32 : i32, i32, i32
  }
}

</mosaic_0001>

<llo_original>
// kernel: tpu_custom_call.1
$region0: #{tpu_custom_call.1}
  #allocation0 [shape = 'u32[]', space=smem, size = 0x4, offset = 0x4, fixed_abs, tag = 'smem constant byte address 0x4 - core index']
  #allocation1 [shape = 'u32[144,128]{1,0:T(1,128)}', space=vmem, size = 0x12000, scoped, tag = 'internal scratch']
  #allocation2 [shape = 'f32[128,128]{1,0:T(8,128)}', space=vmem, size = 0x10000, scoped, tag = 'scratch operand']
  %s0 = inlined_call_operand.hbm [shape: bf16[2,256,256], index: 0, kind: input, shape index: {}]
  %s1 = inlined_call_operand.hbm [shape: bf16[256,128], index: 1, kind: input, shape index: {}]
  %s2 = inlined_call_operand.vmem [shape: f32[1,128], index: 2, kind: input, shape index: {}]
  %s3 = inlined_call_operand.hbm [shape: bf16[2,256,128], index: 3, kind: input, shape index: {}]
  %s4 = inlined_call_operand.hbm [shape: f32[2,256,128], index: 4, kind: output, shape index: {}]
  %s5 = sld [smem:[#allocation0]]
  $region69: #{tpu_custom_call.1} parent=0
    _
  %s7 = ssub.s32 1, %s5
  %s8 = scalar_select 0, %s7, %s5
  $region1: #{tpu_custom_call.1} parent=0
    #allocation3 [shape = 'u8[65536]{0}', space=vmem, size = 0x10000, scoped, tag = 'input window, operand 0']
    #allocation4 [shape = 's32[2]{0}', space=sflag, size = 0x8, scoped, tag = 'scoped memory for tpu_custom_call.1']
    #allocation5 [shape = 's32[2]{0}', space=sflag, size = 0x8, scoped, tag = 'scoped memory for tpu_custom_call.1']
    #allocation6 [shape = 'u8[65536]{0}', space=vmem, size = 0x10000, scoped, tag = 'input window, operand 1, single buffered']
    #allocation7 [shape = 's32[1]{0}', space=sflag, size = 0x4, scoped, tag = 'scoped memory for tpu_custom_call.1']
    #allocation8 [shape = 'u8[65536]{0}', space=vmem, size = 0x10000, scoped, tag = 'input window, operand 3']
    #allocation9 [shape = 'u8[131072]{0}', space=vmem, size = 0x20000, scoped, tag = 'output window, operand 0']
    %9 = vsyncpa [#allocation4], 0
    %s10 = scalar_lea.sflag [#allocation4], 1
    %11 = vsyncpa %s10, 0
    %12 = vsyncpa [#allocation7], 0
    %13 = vsyncpa [#allocation5], 0
    %s14 = scalar_lea.sflag [#allocation5], 1
    %15 = vsyncpa %s14, 0
    loop: start=0, step=1, limit=10
    $region2: #{tpu_custom_call.1} parent=1 // loop_pre_header
      _
    $region3: #{tpu_custom_call.1} parent=1 // loop_header
      %s17 = sphi 0, %s21
      %p18 = scmp.ge.s32.totalorder %s17, 10
      %s24 = sphi 0, %s43
      %s25 = sphi 0, %s39
      %s26 = sphi 0, %s35
      %s27 = sphi 0, %s24
      %s28 = sphi 0, %s25
      %s29 = sphi 0, %s26
      %s30 = sphi 0, %s27
      %s31 = sphi 0, %s28
      %s32 = sphi 0, %s29
      %s50 = sphi 0, %s52
      %s53 = sphi 0, %s50
      %s54 = sphi 0, %s53
      %s70 = sphi 0, %s54
      %s74 = sphi 0, %s74
      %s76 = sphi 0, %s74
      %s77 = sphi 0, %s76
      %s91 = sphi 0, %s77
      %s95 = sphi 0, %s95
      %s97 = sphi 0, %s95
      %s98 = sphi 0, %s97
      %s112 = sphi 0, %s98
      %s120 = sphi 0, %s122
      %s123 = sphi 0, %s120
      %s124 = sphi 0, %s123
      %s140 = sphi 0, %s124
      %s148 = sphi 0, %s150
      %s151 = sphi 0, %s148
      %s152 = sphi 0, %s151
      %s168 = sphi 0, %s152
    $region4: #{tpu_custom_call.1} parent=1 // loop_header_branch
      %20 = sbr.rel (%p18) target = $region8
    $region5: #{tpu_custom_call.1} parent=1 // loop_body
      %s22 = ssub.s32 %s17, 1
      %s23 = ssub.s32 %s17, 2
      %s33 = sadd.s32 1, %s26
      %p34 = scmp.ge.s32.totalorder %s33, 2
      %s35 = scalar_select %p34, 0, %s33
      %s36 = sadd.s32 1, %s25
      %s37 = scalar_select %p34, %s36, %s25
      %p38 = scmp.ge.s32.totalorder %s37, 2
      %s39 = scalar_select %p38, 0, %s37
      %s40 = sadd.s32 1, %s24
      %s41 = scalar_select %p38, %s40, %s24
      %p42 = scmp.ge.s32.totalorder %s41, 2
      %s43 = scalar_select %p42, 0, %s41
      %s44 = ssub.s32 %s24, %s43
      %s45 = ssub.s32 %s25, %s39
      %s46 = sor.u32 %s44, %s45
      %s47 = ssub.s32 %s26, %s35
      %s48 = sor.u32 %s46, %s47
      %p49 = scmp.eq.s32.totalorder %s48, 0
      %s51 = sadd.s32 %s50, 1
      %s52 = scalar_select %p49, %s50, %s51
      %p55 = pneg %p49
      %p56 = scmp.eq.s32.totalorder %s17, 7
      %p57 = por %p55, %p56
      %p58 = scmp.ne.s32.totalorder %s50, %s53
      %p59 = scmp.eq.s32.totalorder %s17, 0
      %p60 = por %p58, %p59
      %p61 = scmp.ne.s32.totalorder %s50, %s53
      %p62 = scmp.eq.s32.totalorder %s22, 7
      %p63 = por %p61, %p62
      %p64 = scmp.ne.s32.totalorder %s53, %s54
      %p65 = scmp.eq.s32.totalorder %s22, 0
      %p66 = por %p64, %p65
      %p67 = scmp.ne.s32.totalorder %s53, %s54
      %p68 = scmp.eq.s32.totalorder %s23, 7
      %p69 = por %p67, %p68
      %p71 = scmp.ne.s32.totalorder %s54, %s70
      %p72 = scmp.eq.s32.totalorder %s23, 0
      %p73 = por %p71, %p72
      %s75 = sadd.s32 %s74, 1
      %p78 = scmp.eq.s32.totalorder %s17, 7
      %p79 = scmp.ne.s32.totalorder %s74, %s76
      %p80 = scmp.eq.s32.totalorder %s17, 0
      %p81 = por %p79, %p80
      %p82 = scmp.ne.s32.totalorder %s74, %s76
      %p83 = scmp.eq.s32.totalorder %s22, 7
      %p84 = por %p82, %p83
      %p85 = scmp.ne.s32.totalorder %s76, %s77
      %p86 = scmp.eq.s32.totalorder %s22, 0
      %p87 = por %p85, %p86
      %p88 = scmp.ne.s32.totalorder %s76, %s77
      %p89 = scmp.eq.s32.totalorder %s23, 7
      %p90 = por %p88, %p89
      %p92 = scmp.ne.s32.totalorder %s77, %s91
      %p93 = scmp.eq.s32.totalorder %s23, 0
      %p94 = por %p92, %p93
      %s96 = sadd.s32 %s95, 1
      %p99 = scmp.eq.s32.totalorder %s17, 7
      %p100 = scmp.ne.s32.totalorder %s95, %s97
      %p101 = scmp.eq.s32.totalorder %s17, 0
      %p102 = por %p100, %p101
      %p103 = scmp.ne.s32.totalorder %s95, %s97
      %p104 = scmp.eq.s32.totalorder %s22, 7
      %p105 = por %p103, %p104
      %p106 = scmp.ne.s32.totalorder %s97, %s98
      %p107 = scmp.eq.s32.totalorder %s22, 0
      %p108 = por %p106, %p107
      %p109 = scmp.ne.s32.totalorder %s97, %s98
      %p110 = scmp.eq.s32.totalorder %s23, 7
      %p111 = por %p109, %p110
      %p113 = scmp.ne.s32.totalorder %s98, %s112
      %p114 = scmp.eq.s32.totalorder %s23, 0
      %p115 = por %p113, %p114
      %s116 = ssub.s32 %s24, %s43
      %s117 = ssub.s32 %s25, %s39
      %s118 = sor.u32 %s116, %s117
      %p119 = scmp.eq.s32.totalorder %s118, 0
      %s121 = sadd.s32 %s120, 1
      %s122 = scalar_select %p119, %s120, %s121
      %p125 = pneg %p119
      %p126 = scmp.eq.s32.totalorder %s17, 7
      %p127 = por %p125, %p126
      %p128 = scmp.ne.s32.totalorder %s120, %s123
      %p129 = scmp.eq.s32.totalorder %s17, 0
      %p130 = por %p128, %p129
      %p131 = scmp.ne.s32.totalorder %s120, %s123
      %p132 = scmp.eq.s32.totalorder %s22, 7
      %p133 = por %p131, %p132
      %p134 = scmp.ne.s32.totalorder %s123, %s124
      %p135 = scmp.eq.s32.totalorder %s22, 0
      %p136 = por %p134, %p135
      %p137 = scmp.ne.s32.totalorder %s123, %s124
      %p138 = scmp.eq.s32.totalorder %s23, 7
      %p139 = por %p137, %p138
      %p141 = scmp.ne.s32.totalorder %s124, %s140
      %p142 = scmp.eq.s32.totalorder %s23, 0
      %p143 = por %p141, %p142
      %s144 = ssub.s32 %s24, %s43
      %s145 = ssub.s32 %s25, %s39
      %s146 = sor.u32 %s144, %s145
      %p147 = scmp.eq.s32.totalorder %s146, 0
      %s149 = sadd.s32 %s148, 1
      %s150 = scalar_select %p147, %s148, %s149
      %p153 = pneg %p147
      %p154 = scmp.eq.s32.totalorder %s17, 7
      %p155 = por %p153, %p154
      %p156 = scmp.ne.s32.totalorder %s148, %s151
      %p157 = scmp.eq.s32.totalorder %s17, 0
      %p158 = por %p156, %p157
      %p159 = scmp.ne.s32.totalorder %s148, %s151
      %p160 = scmp.eq.s32.totalorder %s22, 7
      %p161 = por %p159, %p160
      %p162 = scmp.ne.s32.totalorder %s151, %s152
      %p163 = scmp.eq.s32.totalorder %s22, 0
      %p164 = por %p162, %p163
      %p165 = scmp.ne.s32.totalorder %s151, %s152
      %p166 = scmp.eq.s32.totalorder %s23, 7
      %p167 = por %p165, %p166
      %p169 = scmp.ne.s32.totalorder %s152, %s168
      %p170 = scmp.eq.s32.totalorder %s23, 0
      %p171 = por %p169, %p170
      %p172 = scmp.le.s32.totalorder 1, %s17
      %p173 = scmp.lt.s32.totalorder %s17, 9
      %p174 = pnand %p172, %p173
      %p175 = pneg %p174
      // Predicated region
      $region9: #{tpu_custom_call.1} parent=5 // pred_check
        _
      $region10: #{tpu_custom_call.1} parent=5 // pred_check_branch
        %177 = sbr.rel (%p174) target = $region12
      $region11: #{tpu_custom_call.1} parent=5 // pred_region
        %s178 = ssub.s32 %s17, 1
        // Predicated region
        $region13: #{tpu_custom_call.1} parent=11 // pred_check
          %p179 = pneg %p87
        $region14: #{tpu_custom_call.1} parent=11 // pred_check_branch
          %181 = sbr.rel (%p179) target = $region16
        $region15: #{tpu_custom_call.1} parent=11 // pred_region
          %s183 = ssub.s32 2048, 2048
          %184 = vsyncadd [#allocation7], %s183
          %s185 = sshll.u32 [#allocation6], 4
          %s186 = int_to_ptr.vmem [resolvable:$true] %s185
          %191 = dma.hbm_to_vmem [thread:$0]  %s1, 2048, %s186, [#allocation7], 64, 64, 4
        $region16: #{tpu_custom_call.1} parent=11 // pred_fallthru
          _
        // Predicated region
        $region17: #{tpu_custom_call.1} parent=11 // pred_check
          %p192 = pneg %p108
        $region18: #{tpu_custom_call.1} parent=11 // pred_check_branch
          %194 = sbr.rel (%p192) target = $region20
        $region19: #{tpu_custom_call.1} parent=11 // pred_region
          _
        $region20: #{tpu_custom_call.1} parent=11 // pred_fallthru
          _
      $region12: #{tpu_custom_call.1} parent=5 // pred_fallthru
        _
      %p195 = scmp.lt.s32.totalorder %s17, 8
      // Predicated region
      $region21: #{tpu_custom_call.1} parent=5 // pred_check
        %p196 = pneg %p195
      $region22: #{tpu_custom_call.1} parent=5 // pred_check_branch
        %198 = sbr.rel (%p196) target = $region24
      $region23: #{tpu_custom_call.1} parent=5 // pred_region
        // Predicated region
        $region25: #{tpu_custom_call.1} parent=23 // pred_check
          %p199 = pneg %p60
        $region26: #{tpu_custom_call.1} parent=23 // pred_check_branch
          %201 = sbr.rel (%p199) target = $region28
        $region27: #{tpu_custom_call.1} parent=23 // pred_region
          %s202 = sand.u32 %s17, 1
          %s203 = scalar_lea.sflag [#allocation4], %s202
          %s204 = sand.u32 %s50, 1
          %s205 = smul.addr %s204, 64
          %s206 = scalar_lea.vmem [#allocation3], %s205
          %s207 = smul.u32 16, %s25
          %s209 = ssub.s32 1024, 1024
          %210 = vsyncadd %s203, %s209
          %s211 = smul.addr %s207, 2
          %s212 = sadd.s32 %s26, %s211
          %s213 = smul.addr %s24, 64
          %s214 = sadd.s32 %s212, %s213
          %s215 = smul.addr %s214, 64
          %s216 = scalar_lea.hbm %s0, %s215
          %s217 = sshll.u32 %s206, 4
          %s218 = int_to_ptr.vmem [resolvable:$true] %s217
          %223 = dma.hbm_to_vmem [thread:$0]  %s216, 1024, %s218, %s203, 128, 64, 4
        $region28: #{tpu_custom_call.1} parent=23 // pred_fallthru
          _
        // Predicated region
        $region29: #{tpu_custom_call.1} parent=23 // pred_check
          %p224 = pneg %p130
        $region30: #{tpu_custom_call.1} parent=23 // pred_check_branch
          %226 = sbr.rel (%p224) target = $region32
        $region31: #{tpu_custom_call.1} parent=23 // pred_region
          %s227 = sand.u32 %s17, 1
          %s228 = scalar_lea.sflag [#allocation4], %s227
          %s229 = sand.u32 %s120, 1
          %s230 = smul.addr %s229, 64
          %s231 = scalar_lea.vmem [#allocation8], %s230
          %s232 = smul.u32 16, %s25
          %s234 = ssub.s32 1024, 1024
          %235 = vsyncadd %s228, %s234
          %s236 = smul.addr %s24, 32
          %s237 = sadd.s32 %s232, %s236
          %s238 = smul.addr %s237, 64
          %s239 = scalar_lea.hbm %s3, %s238
          %s240 = sshll.u32 %s231, 4
          %s241 = int_to_ptr.vmem [resolvable:$true] %s240
          %246 = dma.hbm_to_vmem [thread:$0]  %s239, 1024, %s241, %s228, 64, 64, 4
        $region32: #{tpu_custom_call.1} parent=23 // pred_fallthru
          _
      $region24: #{tpu_custom_call.1} parent=5 // pred_fallthru
        _
      %p247 = scmp.le.s32.totalorder 1, %s17
      %p248 = scmp.lt.s32.totalorder %s17, 9
      %p249 = pnand %p247, %p248
      %p250 = pneg %p249
      // Predicated region
      $region33: #{tpu_custom_call.1} parent=5 // pred_check
        _
      $region34: #{tpu_custom_call.1} parent=5 // pred_check_branch
        %252 = sbr.rel (%p249) target = $region36
      $region35: #{tpu_custom_call.1} parent=5 // pred_region
        %s253 = ssub.s32 %s17, 1
        %s254 = sand.u32 %s22, 1
        %s255 = scalar_lea.sflag [#allocation4], %s254
        %s256 = sand.u32 %s53, 1
        %s257 = smul.addr %s256, 64
        %s258 = scalar_lea.vmem [#allocation3], %s257
        // Predicated region
        $region37: #{tpu_custom_call.1} parent=35 // pred_check
          %p259 = pneg %p66
        $region38: #{tpu_custom_call.1} parent=35 // pred_check_branch
          %261 = sbr.rel (%p259) target = $region40
        $region39: #{tpu_custom_call.1} parent=35 // pred_region
          %262 = dma.done %s255, 1024
        $region40: #{tpu_custom_call.1} parent=35 // pred_fallthru
          _
        // Predicated region
        $region41: #{tpu_custom_call.1} parent=35 // pred_check
          %p263 = pneg %p87
        $region42: #{tpu_custom_call.1} parent=35 // pred_check_branch
          %265 = sbr.rel (%p263) target = $region44
        $region43: #{tpu_custom_call.1} parent=35 // pred_region
          %266 = dma.done [#allocation7], 2048
        $region44: #{tpu_custom_call.1} parent=35 // pred_fallthru
          _
        %s267 = sand.u32 %s22, 1
        %s268 = scalar_lea.sflag [#allocation4], %s267
        %s269 = sand.u32 %s123, 1
        %s270 = smul.addr %s269, 64
        %s271 = scalar_lea.vmem [#allocation8], %s270
        // Predicated region
        $region45: #{tpu_custom_call.1} parent=35 // pred_check
          %p272 = pneg %p136
        $region46: #{tpu_custom_call.1} parent=35 // pred_check_branch
          %274 = sbr.rel (%p272) target = $region48
        $region47: #{tpu_custom_call.1} parent=35 // pred_region
          %275 = dma.done %s268, 1024
        $region48: #{tpu_custom_call.1} parent=35 // pred_fallthru
          _
        %s276 = sand.u32 %s22, 1
        %s277 = scalar_lea.sflag [#allocation4], %s276
        %s278 = sand.u32 %s53, 1
        %s279 = smul.addr %s278, 64
        %s280 = scalar_lea.vmem [#allocation3], %s279
        %p281 = pneg %p66
        %p282 = pneg %p63
        %p283 = pneg %p87
        %p284 = pneg %p84
        %p285 = pneg %p108
        %p286 = pneg %p105
        %s287 = sand.u32 %s22, 1
        %s288 = scalar_lea.sflag [#allocation4], %s287
        %s289 = sand.u32 %s123, 1
        %s290 = smul.addr %s289, 64
        %s291 = scalar_lea.vmem [#allocation8], %s290
        %p292 = pneg %p136
        %p293 = pneg %p133
        %p294 = pneg %p164
        %p295 = pneg %p161
        %s296 = sand.u32 %s151, 1
        %s297 = scalar_lea.sflag [#allocation5], %s296
        %s298 = sand.u32 %s151, 1
        %s299 = smul.addr %s298, 128
        %s300 = scalar_lea.vmem [#allocation9], %s299
        %s301 = smul.u32 16, %s28
        %s302 = smul.u32 16, %s28
        %s303 = smul.u32 16, %s28
        %p305 = scmp.eq.s32.totalorder %s29, 0
        // Predicated region
        $region49: #{tpu_custom_call.1} parent=35 // pred_check
          %p306 = pneg %p305
        $region50: #{tpu_custom_call.1} parent=35 // pred_check_branch
          %308 = sbr.rel (%p306) target = $region52
        $region51: #{tpu_custom_call.1} parent=35 // pred_region
          %v309 = vld [vmem:[%s2] sm:$0x1]
          %v311 = vlaneseq
          %v312 = vshrl.u32 %v311, 7
          %v313 = vsub.s32 0, %v312
          %v314 = vrot.slane %v309, %v313
          %316 = vst [vmem:[#allocation2] sm:$0xff] %v314
          %317 = vst [vmem:[#allocation2 + $0x8] sm:$0xff] %v314
          %318 = vst [vmem:[#allocation2 + $0x10] sm:$0xff] %v314
          %319 = vst [vmem:[#allocation2 + $0x18] sm:$0xff] %v314
          %320 = vst [vmem:[#allocation2 + $0x20] sm:$0xff] %v314
          %321 = vst [vmem:[#allocation2 + $0x28] sm:$0xff] %v314
          %322 = vst [vmem:[#allocation2 + $0x30] sm:$0xff] %v314
          %323 = vst [vmem:[#allocation2 + $0x38] sm:$0xff] %v314
          %324 = vst [vmem:[#allocation2 + $0x40] sm:$0xff] %v314
          %325 = vst [vmem:[#allocation2 + $0x48] sm:$0xff] %v314
          %326 = vst [vmem:[#allocation2 + $0x50] sm:$0xff] %v314
          %327 = vst [vmem:[#allocation2 + $0x58] sm:$0xff] %v314
          %328 = vst [vmem:[#allocation2 + $0x60] sm:$0xff] %v314
          %329 = vst [vmem:[#allocation2 + $0x68] sm:$0xff] %v314
          %330 = vst [vmem:[#allocation2 + $0x70] sm:$0xff] %v314
          %331 = vst [vmem:[#allocation2 + $0x78] sm:$0xff] %v314
        $region52: #{tpu_custom_call.1} parent=35 // pred_fallthru
          _
        %s332 = smul.u32 %s29, 128
        %v333 = vld [vmem:[#allocation2] sm:$0xff]
        %v334 = vld [vmem:[#allocation2 + $0x8] sm:$0xff]
        %v335 = vld [vmem:[#allocation2 + $0x10] sm:$0xff]
        %v336 = vld [vmem:[#allocation2 + $0x18] sm:$0xff]
        %v337 = vld [vmem:[#allocation2 + $0x20] sm:$0xff]
        %v338 = vld [vmem:[#allocation2 + $0x28] sm:$0xff]
        %v339 = vld [vmem:[#allocation2 + $0x30] sm:$0xff]
        %v340 = vld [vmem:[#allocation2 + $0x38] sm:$0xff]
        %v341 = vld [vmem:[#allocation2 + $0x40] sm:$0xff]
        %v342 = vld [vmem:[#allocation2 + $0x48] sm:$0xff]
        %v343 = vld [vmem:[#allocation2 + $0x50] sm:$0xff]
        %v344 = vld [vmem:[#allocation2 + $0x58] sm:$0xff]
        %v345 = vld [vmem:[#allocation2 + $0x60] sm:$0xff]
        %v346 = vld [vmem:[#allocation2 + $0x68] sm:$0xff]
        %v347 = vld [vmem:[#allocation2 + $0x70] sm:$0xff]
        %v348 = vld [vmem:[#allocation2 + $0x78] sm:$0xff]
        %v349 = vld [vmem:[%s258] sm:$0xf]
        %v350 = vld [vmem:[%s258 + $0x4] sm:$0xf]
        %v351 = vld [vmem:[%s258 + $0x8] sm:$0xf]
        %v352 = vld [vmem:[%s258 + $0xc] sm:$0xf]
        %v353 = vld [vmem:[%s258 + $0x10] sm:$0xf]
        %v354 = vld [vmem:[%s258 + $0x14] sm:$0xf]
        %v355 = vld [vmem:[%s258 + $0x18] sm:$0xf]
        %v356 = vld [vmem:[%s258 + $0x1c] sm:$0xf]
        %v357 = vld [vmem:[%s258 + $0x20] sm:$0xf]
        %v358 = vld [vmem:[%s258 + $0x24] sm:$0xf]
        %v359 = vld [vmem:[%s258 + $0x28] sm:$0xf]
        %v360 = vld [vmem:[%s258 + $0x2c] sm:$0xf]
        %v361 = vld [vmem:[%s258 + $0x30] sm:$0xf]
        %v362 = vld [vmem:[%s258 + $0x34] sm:$0xf]
        %v363 = vld [vmem:[%s258 + $0x38] sm:$0xf]
        %v364 = vld [vmem:[%s258 + $0x3c] sm:$0xf]
        %s365 = sshra.s32 %s332, 3
        %s366 = sand.u32 %s332, 7
        %s367 = smul.addr %s365, 4
        %s368 = scalar_lea.vmem [#allocation6], %s367
        %v369 = vld [vmem:[%s368] sm:$0xf]
        %v370 = vld [vmem:[%s368 + $0x4] sm:$0xf]
        %v371 = vld [vmem:[%s368 + $0x8] sm:$0xf]
        %v372 = vld [vmem:[%s368 + $0xc] sm:$0xf]
        %v373 = vld [vmem:[%s368 + $0x10] sm:$0xf]
        %v374 = vld [vmem:[%s368 + $0x14] sm:$0xf]
        %v375 = vld [vmem:[%s368 + $0x18] sm:$0xf]
        %v376 = vld [vmem:[%s368 + $0x1c] sm:$0xf]
        %v377 = vld [vmem:[%s368 + $0x20] sm:$0xf]
        %v378 = vld [vmem:[%s368 + $0x24] sm:$0xf]
        %v379 = vld [vmem:[%s368 + $0x28] sm:$0xf]
        %v380 = vld [vmem:[%s368 + $0x2c] sm:$0xf]
        %v381 = vld [vmem:[%s368 + $0x30] sm:$0xf]
        %v382 = vld [vmem:[%s368 + $0x34] sm:$0xf]
        %v383 = vld [vmem:[%s368 + $0x38] sm:$0xf]
        %v384 = vld [vmem:[%s368 + $0x3c] sm:$0xf]
        %v401 = vunpack.c.l.b16 %v349
        %v402 = vunpack.c.l.b16 %v350
        %v403 = vunpack.c.l.b16 %v351
        %v404 = vunpack.c.l.b16 %v352
        %v405 = vunpack.c.l.b16 %v353
        %v406 = vunpack.c.l.b16 %v354
        %v407 = vunpack.c.l.b16 %v355
        %v408 = vunpack.c.l.b16 %v356
        %v409 = vunpack.c.l.b16 %v357
        %v410 = vunpack.c.l.b16 %v358
        %v411 = vunpack.c.l.b16 %v359
        %v412 = vunpack.c.l.b16 %v360
        %v413 = vunpack.c.l.b16 %v361
        %v414 = vunpack.c.l.b16 %v362
        %v415 = vunpack.c.l.b16 %v363
        %v416 = vunpack.c.l.b16 %v364
        %v417 = vpack.c.b16 %v402, %v401
        %v418 = vpack.c.b16 %v404, %v403
        %v419 = vpack.c.b16 %v406, %v405
        %v420 = vpack.c.b16 %v408, %v407
        %v421 = vpack.c.b16 %v410, %v409
        %v422 = vpack.c.b16 %v412, %v411
        %v423 = vpack.c.b16 %v414, %v413
        %v424 = vpack.c.b16 %v416, %v415
        %v449 = vunpack.c.l.b16 %v369
        %v450 = vunpack.c.l.b16 %v370
        %v451 = vunpack.c.l.b16 %v371
        %v452 = vunpack.c.l.b16 %v372
        %v453 = vunpack.c.l.b16 %v373
        %v454 = vunpack.c.l.b16 %v374
        %v455 = vunpack.c.l.b16 %v375
        %v456 = vunpack.c.l.b16 %v376
        %v457 = vunpack.c.l.b16 %v377
        %v458 = vunpack.c.l.b16 %v378
        %v459 = vunpack.c.l.b16 %v379
        %v460 = vunpack.c.l.b16 %v380
        %v461 = vunpack.c.l.b16 %v381
        %v462 = vunpack.c.l.b16 %v382
        %v463 = vunpack.c.l.b16 %v383
        %v464 = vunpack.c.l.b16 %v384
        %v465 = vpack.c.b16 %v450, %v449
        %v466 = vpack.c.b16 %v452, %v451
        %v467 = vpack.c.b16 %v454, %v453
        %v468 = vpack.c.b16 %v456, %v455
        %v469 = vpack.c.b16 %v458, %v457
        %v470 = vpack.c.b16 %v460, %v459
        %v471 = vpack.c.b16 %v462, %v461
        %v472 = vpack.c.b16 %v464, %v463
        %481 = vmatprep.subr.bf16.mxu0 0
        %482 = vmatpush1.bf16.msra.mxu0 %v472
        %483 = vmatprep.subr.bf16.mxu0 0
        %484 = vmatpush1.bf16.msra.mxu0 %v471
        %485 = vmatprep.subr.bf16.mxu0 0
        %486 = vmatpush1.bf16.msra.mxu0 %v470
        %487 = vmatprep.subr.bf16.mxu0 0
        %488 = vmatpush1.bf16.msra.mxu0 %v469
        %489 = vmatprep.subr.bf16.mxu0 0
        %490 = vmatpush1.bf16.msra.mxu0 %v468
        %491 = vmatprep.subr.bf16.mxu0 0
        %492 = vmatpush1.bf16.msra.mxu0 %v467
        %493 = vmatprep.subr.bf16.mxu0 0
        %494 = vmatpush1.bf16.msra.mxu0 %v466
        %495 = vmatprep.subr.bf16.mxu0 0
        %496 = vmatpush1.bf16.msra.mxu0 %v465
        %497 = vmatprep.subr.bf16.mxu0 0
        %498 = vmatpush2.bf16.msra.mxu0 0
        %499 = vmatprep.subr.bf16.mxu0 0
        %500 = vmatpush2.bf16.msra.mxu0 0
        %501 = vmatprep.subr.bf16.mxu0 0
        %502 = vmatpush2.bf16.msra.mxu0 0
        %503 = vmatprep.subr.bf16.mxu0 0
        %504 = vmatpush2.bf16.msra.mxu0 0
        %505 = vmatprep.subr.bf16.mxu0 0
        %506 = vmatpush2.bf16.msra.mxu0 0
        %507 = vmatprep.subr.bf16.mxu0 0
        %508 = vmatpush2.bf16.msra.mxu0 0
        %509 = vmatprep.subr.bf16.mxu0 0
        %510 = vmatpush2.bf16.msra.mxu0 0
        %511 = vmatprep.subr.bf16.mxu0 0
        %512 = vmatpush2.bf16.msra.mxu0 0
        %513 = vmatprep.mubr.bf16.mxu0 0
        %514 = vmatmul.mubr.bf16.gmra.mxu0 %v417
        %v515 = vpop.f32.mrf.mxu0
        %v516 = vadd.f32 0.0, %v515
        %v517 = vpop.f32.mrf.mxu0
        %v518 = vpop.f32.mrf.mxu0
        %v519 = vadd.f32 0.0, %v518
        %v520 = vpop.f32.mrf.mxu0
        %521 = vmatprep.mubr.bf16.mxu0 0
        %522 = vmatmul.mubr.bf16.gmra.mxu0 %v418
        %v523 = vpop.f32.mrf.mxu0
        %v524 = vadd.f32 0.0, %v523
        %v525 = vpop.f32.mrf.mxu0
        %v526 = vpop.f32.mrf.mxu0
        %v527 = vadd.f32 0.0, %v526
        %v528 = vpop.f32.mrf.mxu0
        %529 = vmatprep.mubr.bf16.mxu0 0
        %530 = vmatmul.mubr.bf16.gmra.mxu0 %v419
        %v531 = vpop.f32.mrf.mxu0
        %v532 = vadd.f32 0.0, %v531
        %v533 = vpop.f32.mrf.mxu0
        %v534 = vpop.f32.mrf.mxu0
        %v535 = vadd.f32 0.0, %v534
        %v536 = vpop.f32.mrf.mxu0
        %537 = vmatprep.mubr.bf16.mxu0 0
        %538 = vmatmul.mubr.bf16.gmra.mxu0 %v420
        %v539 = vpop.f32.mrf.mxu0
        %v540 = vadd.f32 0.0, %v539
        %v541 = vpop.f32.mrf.mxu0
        %v542 = vpop.f32.mrf.mxu0
        %v543 = vadd.f32 0.0, %v542
        %v544 = vpop.f32.mrf.mxu0
        %545 = vmatprep.mubr.bf16.mxu0 0
        %546 = vmatmul.mubr.bf16.gmra.mxu0 %v421
        %v547 = vpop.f32.mrf.mxu0
        %v548 = vadd.f32 0.0, %v547
        %v549 = vpop.f32.mrf.mxu0
        %v550 = vpop.f32.mrf.mxu0
        %v551 = vadd.f32 0.0, %v550
        %v552 = vpop.f32.mrf.mxu0
        %553 = vmatprep.mubr.bf16.mxu0 0
        %554 = vmatmul.mubr.bf16.gmra.mxu0 %v422
        %v555 = vpop.f32.mrf.mxu0
        %v556 = vadd.f32 0.0, %v555
        %v557 = vpop.f32.mrf.mxu0
        %v558 = vpop.f32.mrf.mxu0
        %v559 = vadd.f32 0.0, %v558
        %v560 = vpop.f32.mrf.mxu0
        %561 = vmatprep.mubr.bf16.mxu0 0
        %562 = vmatmul.mubr.bf16.gmra.mxu0 %v423
        %v563 = vpop.f32.mrf.mxu0
        %v564 = vadd.f32 0.0, %v563
        %v565 = vpop.f32.mrf.mxu0
        %v566 = vpop.f32.mrf.mxu0
        %v567 = vadd.f32 0.0, %v566
        %v568 = vpop.f32.mrf.mxu0
        %569 = vmatprep.mubr.bf16.mxu0 0
        %570 = vmatmul.mubr.bf16.gmra.mxu0 %v424
        %v571 = vpop.f32.mrf.mxu0
        %v572 = vadd.f32 0.0, %v571
        %v573 = vpop.f32.mrf.mxu0
        %v574 = vpop.f32.mrf.mxu0
        %v575 = vadd.f32 0.0, %v574
        %v576 = vpop.f32.mrf.mxu0
        %577 = vdwg.mxu0
        %v578 = vadd.f32 %v333, %v516
        %v579 = vadd.f32 %v334, %v519
        %v580 = vadd.f32 %v335, %v524
        %v581 = vadd.f32 %v336, %v527
        %v582 = vadd.f32 %v337, %v532
        %v583 = vadd.f32 %v338, %v535
        %v584 = vadd.f32 %v339, %v540
        %v585 = vadd.f32 %v340, %v543
        %v586 = vadd.f32 %v341, %v548
        %v587 = vadd.f32 %v342, %v551
        %v588 = vadd.f32 %v343, %v556
        %v589 = vadd.f32 %v344, %v559
        %v590 = vadd.f32 %v345, %v564
        %v591 = vadd.f32 %v346, %v567
        %v592 = vadd.f32 %v347, %v572
        %v593 = vadd.f32 %v348, %v575
        %594 = vst [vmem:[#allocation2] sm:$0xff] %v578
        %595 = vst [vmem:[#allocation2 + $0x8] sm:$0xff] %v579
        %596 = vst [vmem:[#allocation2 + $0x10] sm:$0xff] %v580
        %597 = vst [vmem:[#allocation2 + $0x18] sm:$0xff] %v581
        %598 = vst [vmem:[#allocation2 + $0x20] sm:$0xff] %v582
        %599 = vst [vmem:[#allocation2 + $0x28] sm:$0xff] %v583
        %600 = vst [vmem:[#allocation2 + $0x30] sm:$0xff] %v584
        %601 = vst [vmem:[#allocation2 + $0x38] sm:$0xff] %v585
        %602 = vst [vmem:[#allocation2 + $0x40] sm:$0xff] %v586
        %603 = vst [vmem:[#allocation2 + $0x48] sm:$0xff] %v587
        %604 = vst [vmem:[#allocation2 + $0x50] sm:$0xff] %v588
        %605 = vst [vmem:[#allocation2 + $0x58] sm:$0xff] %v589
        %606 = vst [vmem:[#allocation2 + $0x60] sm:$0xff] %v590
        %607 = vst [vmem:[#allocation2 + $0x68] sm:$0xff] %v591
        %608 = vst [vmem:[#allocation2 + $0x70] sm:$0xff] %v592
        %609 = vst [vmem:[#allocation2 + $0x78] sm:$0xff] %v593
        %p610 = scmp.eq.s32.totalorder %s29, 1
        // Predicated region
        $region53: #{tpu_custom_call.1} parent=35 // pred_check
          %p611 = pneg %p610
        $region54: #{tpu_custom_call.1} parent=35 // pred_check_branch
          %613 = sbr.rel (%p611) target = $region56
        $region55: #{tpu_custom_call.1} parent=35 // pred_region
          %v614 = vld [vmem:[#allocation2] sm:$0xff]
          %v615 = vld [vmem:[#allocation2 + $0x8] sm:$0xff]
          %v616 = vld [vmem:[#allocation2 + $0x10] sm:$0xff]
          %v617 = vld [vmem:[#allocation2 + $0x18] sm:$0xff]
          %v618 = vld [vmem:[#allocation2 + $0x20] sm:$0xff]
          %v619 = vld [vmem:[#allocation2 + $0x28] sm:$0xff]
          %v620 = vld [vmem:[#allocation2 + $0x30] sm:$0xff]
          %v621 = vld [vmem:[#allocation2 + $0x38] sm:$0xff]
          %v622 = vld [vmem:[#allocation2 + $0x40] sm:$0xff]
          %v623 = vld [vmem:[#allocation2 + $0x48] sm:$0xff]
          %v624 = vld [vmem:[#allocation2 + $0x50] sm:$0xff]
          %v625 = vld [vmem:[#allocation2 + $0x58] sm:$0xff]
          %v626 = vld [vmem:[#allocation2 + $0x60] sm:$0xff]
          %v627 = vld [vmem:[#allocation2 + $0x68] sm:$0xff]
          %v628 = vld [vmem:[#allocation2 + $0x70] sm:$0xff]
          %v629 = vld [vmem:[#allocation2 + $0x78] sm:$0xff]
          %v630 = vmax.f32 %v614, 0.0
          %v631 = vmax.f32 %v615, 0.0
          %v632 = vmax.f32 %v616, 0.0
          %v633 = vmax.f32 %v617, 0.0
          %v634 = vmax.f32 %v618, 0.0
          %v635 = vmax.f32 %v619, 0.0
          %v636 = vmax.f32 %v620, 0.0
          %v637 = vmax.f32 %v621, 0.0
          %v638 = vmax.f32 %v622, 0.0
          %v639 = vmax.f32 %v623, 0.0
          %v640 = vmax.f32 %v624, 0.0
          %v641 = vmax.f32 %v625, 0.0
          %v642 = vmax.f32 %v626, 0.0
          %v643 = vmax.f32 %v627, 0.0
          %v644 = vmax.f32 %v628, 0.0
          %v645 = vmax.f32 %v629, 0.0
          %v646 = vld [vmem:[%s271] sm:$0xf]
          %v647 = vld [vmem:[%s271 + $0x4] sm:$0xf]
          %v648 = vld [vmem:[%s271 + $0x8] sm:$0xf]
          %v649 = vld [vmem:[%s271 + $0xc] sm:$0xf]
          %v650 = vld [vmem:[%s271 + $0x10] sm:$0xf]
          %v651 = vld [vmem:[%s271 + $0x14] sm:$0xf]
          %v652 = vld [vmem:[%s271 + $0x18] sm:$0xf]
          %v653 = vld [vmem:[%s271 + $0x1c] sm:$0xf]
          %v654 = vld [vmem:[%s271 + $0x20] sm:$0xf]
          %v655 = vld [vmem:[%s271 + $0x24] sm:$0xf]
          %v656 = vld [vmem:[%s271 + $0x28] sm:$0xf]
          %v657 = vld [vmem:[%s271 + $0x2c] sm:$0xf]
          %v658 = vld [vmem:[%s271 + $0x30] sm:$0xf]
          %v659 = vld [vmem:[%s271 + $0x34] sm:$0xf]
          %v660 = vld [vmem:[%s271 + $0x38] sm:$0xf]
          %v661 = vld [vmem:[%s271 + $0x3c] sm:$0xf]
          %v662 = vunpack.c.l.bf16 %v646
          %v663 = vunpack.c.l.bf16 %v647
          %v664 = vunpack.c.l.bf16 %v648
          %v665 = vunpack.c.l.bf16 %v649
          %v666 = vunpack.c.l.bf16 %v650
          %v667 = vunpack.c.l.bf16 %v651
          %v668 = vunpack.c.l.bf16 %v652
          %v669 = vunpack.c.l.bf16 %v653
          %v670 = vunpack.c.l.bf16 %v654
          %v671 = vunpack.c.l.bf16 %v655
          %v672 = vunpack.c.l.bf16 %v656
          %v673 = vunpack.c.l.bf16 %v657
          %v674 = vunpack.c.l.bf16 %v658
          %v675 = vunpack.c.l.bf16 %v659
          %v676 = vunpack.c.l.bf16 %v660
          %v677 = vunpack.c.l.bf16 %v661
          %v678 = vadd.f32 %v630, %v662
          %v679 = vadd.f32 %v631, %v663
          %v680 = vadd.f32 %v632, %v664
          %v681 = vadd.f32 %v633, %v665
          %v682 = vadd.f32 %v634, %v666
          %v683 = vadd.f32 %v635, %v667
          %v684 = vadd.f32 %v636, %v668
          %v685 = vadd.f32 %v637, %v669
          %v686 = vadd.f32 %v638, %v670
          %v687 = vadd.f32 %v639, %v671
          %v688 = vadd.f32 %v640, %v672
          %v689 = vadd.f32 %v641, %v673
          %v690 = vadd.f32 %v642, %v674
          %v691 = vadd.f32 %v643, %v675
          %v692 = vadd.f32 %v644, %v676
          %v693 = vadd.f32 %v645, %v677
          %694 = vst [vmem:[%s300] sm:$0xff] %v678
          %695 = vst [vmem:[%s300 + $0x8] sm:$0xff] %v679
          %696 = vst [vmem:[%s300 + $0x10] sm:$0xff] %v680
          %697 = vst [vmem:[%s300 + $0x18] sm:$0xff] %v681
          %698 = vst [vmem:[%s300 + $0x20] sm:$0xff] %v682
          %699 = vst [vmem:[%s300 + $0x28] sm:$0xff] %v683
          %700 = vst [vmem:[%s300 + $0x30] sm:$0xff] %v684
          %701 = vst [vmem:[%s300 + $0x38] sm:$0xff] %v685
          %702 = vst [vmem:[%s300 + $0x40] sm:$0xff] %v686
          %703 = vst [vmem:[%s300 + $0x48] sm:$0xff] %v687
          %704 = vst [vmem:[%s300 + $0x50] sm:$0xff] %v688
          %705 = vst [vmem:[%s300 + $0x58] sm:$0xff] %v689
          %706 = vst [vmem:[%s300 + $0x60] sm:$0xff] %v690
          %707 = vst [vmem:[%s300 + $0x68] sm:$0xff] %v691
          %708 = vst [vmem:[%s300 + $0x70] sm:$0xff] %v692
          %709 = vst [vmem:[%s300 + $0x78] sm:$0xff] %v693
        $region56: #{tpu_custom_call.1} parent=35 // pred_fallthru
          _
        %s710 = sand.u32 %s151, 1
        %s711 = scalar_lea.sflag [#allocation5], %s710
        %s712 = sand.u32 %s151, 1
        %s713 = smul.addr %s712, 128
        %s714 = scalar_lea.vmem [#allocation9], %s713
        // Predicated region
        $region57: #{tpu_custom_call.1} parent=35 // pred_check
          %p715 = pneg %p161
        $region58: #{tpu_custom_call.1} parent=35 // pred_check_branch
          %717 = sbr.rel (%p715) target = $region60
        $region59: #{tpu_custom_call.1} parent=35 // pred_region
          %s718 = smul.u32 16, %s28
          %s720 = ssub.s32 2048, 2048
          %721 = vsyncadd %s711, %s720
          %s722 = smul.addr %s27, 32
          %s723 = sadd.s32 %s718, %s722
          %s724 = smul.addr %s723, 128
          %s725 = scalar_lea.hbm %s4, %s724
          %s726 = sshll.u32 %s714, 4
          %s727 = int_to_ptr.vmem [resolvable:$true] %s726
          %732 = dma.vmem_to_hbm [thread:$0]  %s727, 2048, %s725, %s711, 128, 128, 8
        $region60: #{tpu_custom_call.1} parent=35 // pred_fallthru
          _
      $region36: #{tpu_custom_call.1} parent=5 // pred_fallthru
        _
      %p733 = scmp.le.s32.totalorder 2, %s17
      // Predicated region
      $region61: #{tpu_custom_call.1} parent=5 // pred_check
        %p734 = pneg %p733
      $region62: #{tpu_custom_call.1} parent=5 // pred_check_branch
        %736 = sbr.rel (%p734) target = $region64
      $region63: #{tpu_custom_call.1} parent=5 // pred_region
        %s737 = ssub.s32 %s17, 2
        // Predicated region
        $region65: #{tpu_custom_call.1} parent=63 // pred_check
          %p738 = pneg %p167
        $region66: #{tpu_custom_call.1} parent=63 // pred_check_branch
          %740 = sbr.rel (%p738) target = $region68
        $region67: #{tpu_custom_call.1} parent=63 // pred_region
          %s741 = sand.u32 %s152, 1
          %s742 = scalar_lea.sflag [#allocation5], %s741
          %s743 = sand.u32 %s152, 1
          %s744 = smul.addr %s743, 128
          %s745 = scalar_lea.vmem [#allocation9], %s744
          %746 = dma.done %s742, 2048
        $region68: #{tpu_custom_call.1} parent=63 // pred_fallthru
          _
      $region64: #{tpu_custom_call.1} parent=5 // pred_fallthru
        _
    $region6: #{tpu_custom_call.1} parent=1 // loop_footer
      %s21 = sadd.s32 1, %s17
    $region7: #{tpu_custom_call.1} parent=1 // loop_footer_branch
      %16 = sbr.rel target = $region3
    $region8: #{tpu_custom_call.1} parent=1 // loop_exit
      _
    %747 = vsyncpa [#allocation4], 1
    %s748 = scalar_lea.sflag [#allocation4], 1
    %749 = vsyncpa %s748, 1
    %750 = vsyncpa [#allocation7], 1
    %751 = vsyncpa [#allocation5], 1
    %s752 = scalar_lea.sflag [#allocation5], 1
    %753 = vsyncpa %s752, 1

</llo_original>
